<compile_context>
chip_gen: v7x
topology: tpu7x:2x2x1
jax: 0.10.0
libtpu: 0.0.40
codegen_flags: <defaults>
</compile_context>

<pallas_src>
import functools

import jax
import jax.numpy as jnp
from jax.experimental import pallas as pl
from jax.experimental.pallas import tpu as pltpu

LN_EPS = 1e-5  # PyTorch nn.LayerNorm default


def _round_up(x, m):
    return (x + m - 1) // m * m


def _vmem_capacity_bytes():
    try:
        info = pltpu.get_tpu_info()
        cap = getattr(info, "vmem_capacity_bytes", None)
        if cap:
            return int(cap)
    except Exception:
        pass
    return 64 * 1024 * 1024  # conservative fallback (v7x per-TensorCore)


def _prenorm_linear_kernel(x_ref, g_ref, b_ref, w_ref, bias_ref, o_ref, y_ref,
                           *, d_real, d_pad):
    # x_ref: (tm, D_pad); g/b: (1, D_pad); w: (D_pad, tn); bias: (1, tn)
    # y_ref: (tm, D_pad) VMEM scratch holding the LayerNorm output in the
    # compute dtype.  LN is computed once per row tile (j == 0) and reused for
    # every output-column tile of that row tile (axis 1 is "arbitrary").
    @pl.when(pl.program_id(1) == 0)
    def _():
        x = x_ref[...].astype(jnp.float32)
        inv_d = jnp.float32(1.0 / d_real)
        mean = jnp.sum(x, axis=-1, keepdims=True) * inv_d
        xc = x - mean
        if d_pad != d_real:
            # zero the padded feature lanes so the second-pass variance is exact
            lane = jax.lax.broadcasted_iota(jnp.int32, x.shape, dimension=1)
            xc = jnp.where(lane < d_real, xc, 0.0)
        var = jnp.sum(xc * xc, axis=-1, keepdims=True) * inv_d   # biased (PyTorch)
        xhat = xc * jax.lax.rsqrt(var + LN_EPS)
        y = xhat * g_ref[...].astype(jnp.float32) + b_ref[...].astype(jnp.float32)
        y_ref[...] = y.astype(y_ref.dtype)

    out = jnp.dot(y_ref[...], w_ref[...], preferred_element_type=jnp.float32)
    out = out + bias_ref[...].astype(jnp.float32)
    o_ref[...] = out.astype(o_ref.dtype)


@functools.partial(jax.jit, static_argnames=("tm", "tn", "compute_dtype"))
def prenorm_linear(x, gamma, beta, w, bias, *, tm=None, tn=None,
                   compute_dtype=None):
    """PreNorm(dim, Linear)(x): fn(LayerNorm(x)).

    x:     [B, N, D]
    gamma: [D]        (LayerNorm weight)
    beta:  [D]        (LayerNorm bias)
    w:     [D, Dout]  (Linear weight, in x out layout)
    bias:  [Dout]
    returns [B, N, Dout]
    """
    B, N, D = x.shape
    Dw, Dout = w.shape
    assert Dw == D
    M = B * N

    cdt = jnp.dtype(compute_dtype) if compute_dtype is not None else jnp.dtype(w.dtype)
    x_it = jnp.dtype(x.dtype).itemsize
    cd_it = cdt.itemsize
    out_it = jnp.dtype(x.dtype).itemsize

    sub = {4: 8, 2: 16, 1: 32}.get(x_it, 8)
    D_pad = _round_up(D, 128)
    Dout_pad = _round_up(Dout, 128)

    # ---- generation-aware VMEM budget (leave headroom below physical) ----
    vmem_budget = (_vmem_capacity_bytes() * 3) // 4

    # streamed-W column tile: largest 128-multiple <= hint that divides Dout_pad
    tn_hint = 512 if tn is None else max(128, _round_up(tn, 128))
    tn_stream = 128
    c = min(tn_hint, Dout_pad)
    while c >= 128:
        if Dout_pad % c == 0:
            tn_stream = c
            break
        c -= 128

    # row-tile candidates (largest first)
    tm_cap = _round_up(M, sub)
    if tm is not None:
        tm_cap = min(tm_cap, max(sub, _round_up(tm, sub)))
    else:
        tm_cap = min(tm_cap, 1024)
    tm_cands = []
    t = tm_cap
    while True:
        tm_cands.append(t)
        if t <= sub:
            break
        t = max(sub, (t // 2) // sub * sub)

    def fits(tm_c, tn_c, resident):
        byt = 2 * tm_c * D_pad * x_it          # x tile (double-buffered)
        byt += 2 * tm_c * tn_c * out_it        # out tile (double-buffered)
        byt += tm_c * D_pad * cd_it            # LN scratch
        byt += 3 * tm_c * D_pad * 4            # f32 LN temporaries headroom
        wcols = Dout_pad if resident else tn_c
        byt += 2 * D_pad * wcols * cd_it       # W buffers (const idx still reserves 2)
        byt += 4 * (D_pad + Dout_pad) * 4      # gamma / beta / bias (tiny)
        return byt <= vmem_budget

    def best_tm(tn_c, resident):
        for cand in tm_cands:
            if fits(cand, tn_c, resident):
                return cand
        return None

    tm_res = best_tm(Dout_pad, True)     # W fully resident (DMA'd once)
    tm_str = best_tm(tn_stream, False)   # W streamed in column tiles

    if tm_res is not None and tm_res >= min(256, tm_cap):
        tm_eff, tn_eff = tm_res, Dout_pad
    elif tm_str is not None:
        tm_eff, tn_eff = tm_str, tn_stream
    elif tm_res is not None:
        tm_eff, tn_eff = tm_res, Dout_pad
    else:
        tm_eff, tn_eff = sub, 128            # last resort

    # ---- pad feature dims only when misaligned (rows handled by partial blocks) ----
    x2 = x.reshape(M, D)
    g2 = gamma.reshape(1, D)
    b2 = beta.reshape(1, D)
    if D_pad != D:
        x2 = jnp.pad(x2, ((0, 0), (0, D_pad - D)))
        g2 = jnp.pad(g2, ((0, 0), (0, D_pad - D)))
        b2 = jnp.pad(b2, ((0, 0), (0, D_pad - D)))
    w2 = w.astype(cdt)
    if D_pad != D or Dout_pad != Dout:
        w2 = jnp.pad(w2, ((0, D_pad - D), (0, Dout_pad - Dout)))
    bias2 = bias.reshape(1, Dout)
    if Dout_pad != Dout:
        bias2 = jnp.pad(bias2, ((0, 0), (0, Dout_pad - Dout)))

    kernel = functools.partial(_prenorm_linear_kernel,
                               d_real=int(D), d_pad=int(D_pad))

    grid = (pl.cdiv(M, tm_eff), Dout_pad // tn_eff)

    flops = 2 * M * D_pad * Dout_pad
    bytes_accessed = (x2.size * x2.dtype.itemsize
                      + w2.size * w2.dtype.itemsize
                      + g2.size * g2.dtype.itemsize
                      + b2.size * b2.dtype.itemsize
                      + bias2.size * bias2.dtype.itemsize
                      + M * Dout_pad * out_it)
    cost = pl.CostEstimate(flops=flops, transcendentals=M,
                           bytes_accessed=bytes_accessed)

    out2 = pl.pallas_call(
        kernel,
        out_shape=jax.ShapeDtypeStruct((M, Dout_pad), x.dtype),
        grid_spec=pltpu.PrefetchScalarGridSpec(
            num_scalar_prefetch=0,
            grid=grid,
            in_specs=[
                pl.BlockSpec((tm_eff, D_pad), lambda i, j: (i, 0)),   # x rows
                pl.BlockSpec((1, D_pad), lambda i, j: (0, 0)),        # gamma
                pl.BlockSpec((1, D_pad), lambda i, j: (0, 0)),        # beta
                pl.BlockSpec((D_pad, tn_eff), lambda i, j: (0, j)),   # W (const when tn==Dout_pad)
                pl.BlockSpec((1, tn_eff), lambda i, j: (0, j)),       # bias
            ],
            out_specs=pl.BlockSpec((tm_eff, tn_eff), lambda i, j: (i, j)),
            scratch_shapes=[pltpu.VMEM((tm_eff, D_pad), cdt)],        # LN result
        ),
        compiler_params=pltpu.CompilerParams(
            dimension_semantics=("parallel", "arbitrary"),
            vmem_limit_bytes=int(vmem_budget),
        ),
        cost_estimate=cost,
    )(x2, g2, b2, w2, bias2)

    out2 = out2[:, :Dout]
    return out2.reshape(B, N, Dout)


def _reference(x, gamma, beta, w, bias):
    xf = x.astype(jnp.float32)
    mean = jnp.mean(xf, axis=-1, keepdims=True)
    var = jnp.mean((xf - mean) ** 2, axis=-1, keepdims=True)
    xhat = (xf - mean) / jnp.sqrt(var + LN_EPS)
    y = xhat * gamma.astype(jnp.float32) + beta.astype(jnp.float32)
    return (y @ w.astype(jnp.float32) + bias.astype(jnp.float32)).astype(x.dtype)


if __name__ == "__main__":
    # PreNorm(dim=32, fn=Linear(32, 32)) on x of shape [batch=2, tokens=8, dim=32]
    B, N, D, Dout = 2, 8, 32, 32

    key = jax.random.PRNGKey(0)
    kx, kw, kb, kg, kbt = jax.random.split(key, 5)

    x = jax.random.normal(kx, (B, N, D), dtype=jnp.float32)

    # LayerNorm params (non-trivial affine to exercise the full path)
    gamma = 1.0 + 0.1 * jax.random.normal(kg, (D,), dtype=jnp.float32)
    beta = 0.1 * jax.random.normal(kbt, (D,), dtype=jnp.float32)

    # fn = Linear(D, Dout): deterministic synthetic init
    w = jax.random.normal(kw, (D, Dout), dtype=jnp.float32) * (1.0 / jnp.sqrt(D))
    bias = jax.random.normal(kb, (Dout,), dtype=jnp.float32) * 0.01

    out = prenorm_linear(x, gamma, beta, w, bias)
    out = jax.block_until_ready(out)

    ref = _reference(x, gamma, beta, w, bias)
    assert out.shape == (B, N, Dout)
    assert jnp.allclose(out, ref, atol=1e-4, rtol=1e-4), (
        float(jnp.max(jnp.abs(out - ref))))

    print("KERNEL_OK")
</pallas_src>

<mosaic_0001>
module attributes {stable_mosaic.version = 11 : i64} {
  func.func @_prenorm_linear_kernel(%arg0: i32, %arg1: i32, %arg2: memref<16x128xf32, #tpu.memory_space<vmem>>, %arg3: memref<1x128xf32, #tpu.memory_space<vmem>>, %arg4: memref<1x128xf32, #tpu.memory_space<vmem>>, %arg5: memref<128x128xf32, #tpu.memory_space<vmem>>, %arg6: memref<1x128xf32, #tpu.memory_space<vmem>>, %arg7: memref<16x128xf32, #tpu.memory_space<vmem>>, %arg8: memref<16x128xf32, #tpu.memory_space<vmem>>) attributes {dimension_semantics = [#tpu.dimension_semantics<parallel>, #tpu.dimension_semantics<arbitrary>], iteration_bounds = array<i64: 1, 1>, scalar_prefetch = 0 : i64, scratch_operands = 1 : i64, tpu.core_type = #tpu.core_type<tc>, window_params = [{transform_indices = @transform_0, window_bounds = array<i64: 16, 128>}, {pipeline_mode = #tpu.pipeline_mode<synchronous>, transform_indices = @transform_1, window_bounds = array<i64: 1, 128>}, {pipeline_mode = #tpu.pipeline_mode<synchronous>, transform_indices = @transform_2, window_bounds = array<i64: 1, 128>}, {transform_indices = @transform_3, window_bounds = array<i64: 128, 128>}, {transform_indices = @transform_4, window_bounds = array<i64: 1, 128>}, {transform_indices = @transform_5, window_bounds = array<i64: 16, 128>}]} {
    %c0_i32 = arith.constant 0 : i32
    %0 = arith.cmpi eq, %arg1, %c0_i32 : i32
    %1 = arith.extui %0 : i1 to i32
    %c0_i32_0 = arith.constant 0 : i32
    %2 = arith.cmpi ne, %1, %c0_i32_0 : i32
    scf.if %2 {
      %c0_8 = arith.constant 0 : index
      %c0_9 = arith.constant 0 : index
      %10 = vector.load %arg2[%c0_8, %c0_9] : memref<16x128xf32, #tpu.memory_space<vmem>>, vector<16x128xf32>
      %cst_10 = arith.constant dense<0.000000e+00> : vector<16xf32>
      %11 = vector.multi_reduction <add>, %10, %cst_10 [1] : vector<16x128xf32> to vector<16xf32>
      %12 = vector.shape_cast %11 : vector<16xf32> to vector<16x1xf32>
      %cst_11 = arith.constant 3.125000e-02 : f32
      %13 = vector.broadcast %cst_11 : f32 to vector<16x1xf32>
      %14 = arith.mulf %12, %13 : vector<16x1xf32>
      %15 = vector.broadcast %14 : vector<16x1xf32> to vector<16x128xf32>
      %16 = arith.subf %10, %15 : vector<16x128xf32>
      %17 = tpu.iota {dimensions = array<i32: 1>} : vector<16x128xi32>
      %c32_i32 = arith.constant 32 : i32
      %18 = vector.broadcast %c32_i32 : i32 to vector<16x128xi32>
      %19 = arith.cmpi slt, %17, %18 : vector<16x128xi32>
      %cst_12 = arith.constant 0.000000e+00 : f32
      %20 = vector.broadcast %cst_12 : f32 to vector<16x128xf32>
      %21 = arith.select %19, %16, %20 : vector<16x128xi1>, vector<16x128xf32>
      %22 = arith.mulf %21, %21 : vector<16x128xf32>
      %cst_13 = arith.constant dense<0.000000e+00> : vector<16xf32>
      %23 = vector.multi_reduction <add>, %22, %cst_13 [1] : vector<16x128xf32> to vector<16xf32>
      %24 = vector.shape_cast %23 : vector<16xf32> to vector<16x1xf32>
      %cst_14 = arith.constant 3.125000e-02 : f32
      %25 = vector.broadcast %cst_14 : f32 to vector<16x1xf32>
      %26 = arith.mulf %24, %25 : vector<16x1xf32>
      %cst_15 = arith.constant 9.99999974E-6 : f32
      %27 = vector.broadcast %cst_15 : f32 to vector<16x1xf32>
      %28 = arith.addf %26, %27 : vector<16x1xf32>
      %29 = math.rsqrt %28 : vector<16x1xf32>
      %30 = vector.broadcast %29 : vector<16x1xf32> to vector<16x128xf32>
      %31 = arith.mulf %21, %30 : vector<16x128xf32>
      %c0_16 = arith.constant 0 : index
      %c0_17 = arith.constant 0 : index
      %32 = vector.load %arg3[%c0_16, %c0_17] : memref<1x128xf32, #tpu.memory_space<vmem>>, vector<1x128xf32>
      %33 = vector.broadcast %32 : vector<1x128xf32> to vector<16x128xf32>
      %34 = arith.mulf %31, %33 : vector<16x128xf32>
      %c0_18 = arith.constant 0 : index
      %c0_19 = arith.constant 0 : index
      %35 = vector.load %arg4[%c0_18, %c0_19] : memref<1x128xf32, #tpu.memory_space<vmem>>, vector<1x128xf32>
      %36 = vector.broadcast %35 : vector<1x128xf32> to vector<16x128xf32>
      %37 = arith.addf %34, %36 : vector<16x128xf32>
      %c0_20 = arith.constant 0 : index
      %c0_21 = arith.constant 0 : index
      %38 = vector.load %arg8[%c0_20, %c0_21] : memref<16x128xf32, #tpu.memory_space<vmem>>, vector<16x128xf32>
      tpu.vector_store %arg8[%c0_20, %c0_21], %37 {strides = array<i32>} : memref<16x128xf32, #tpu.memory_space<vmem>>, vector<16x128xf32>,
    } else {
    }
    %c0 = arith.constant 0 : index
    %c0_1 = arith.constant 0 : index
    %3 = vector.load %arg8[%c0, %c0_1] : memref<16x128xf32, #tpu.memory_space<vmem>>, vector<16x128xf32>
    %c0_2 = arith.constant 0 : index
    %c0_3 = arith.constant 0 : index
    %4 = vector.load %arg5[%c0_2, %c0_3] : memref<128x128xf32, #tpu.memory_space<vmem>>, vector<128x128xf32>
    %cst = arith.constant dense<0.000000e+00> : vector<16x128xf32>
    %5 = tpu.matmul %3, %4, %cst {dimension_numbers = #tpu.dot_dimension_numbers<[1], [0], [0], [1], [0, 0, 1, 1], [], []>} : vector<16x128xf32>, vector<128x128xf32>, vector<16x128xf32> -> vector<16x128xf32>
    %c0_4 = arith.constant 0 : index
    %c0_5 = arith.constant 0 : index
    %6 = vector.load %arg6[%c0_4, %c0_5] : memref<1x128xf32, #tpu.memory_space<vmem>>, vector<1x128xf32>
    %7 = vector.broadcast %6 : vector<1x128xf32> to vector<16x128xf32>
    %8 = arith.addf %5, %7 : vector<16x128xf32>
    %c0_6 = arith.constant 0 : index
    %c0_7 = arith.constant 0 : index
    %9 = vector.load %arg7[%c0_6, %c0_7] : memref<16x128xf32, #tpu.memory_space<vmem>>, vector<16x128xf32>
    tpu.vector_store %arg7[%c0_6, %c0_7], %8 {strides = array<i32>} : memref<16x128xf32, #tpu.memory_space<vmem>>, vector<16x128xf32>,
    return
  }
  func.func @transform_0(%arg0: i32, %arg1: i32) -> (i32, i32) {
    %c0_i32 = arith.constant 0 : i32
    %c0_i32_0 = arith.constant 0 : i32
    return %arg0, %c0_i32 : i32, i32
  }
  func.func @transform_1(%arg0: i32, %arg1: i32) -> (i32, i32) {
    %c0_i32 = arith.constant 0 : i32
    %c0_i32_0 = arith.constant 0 : i32
    %c0_i32_1 = arith.constant 0 : i32
    return %c0_i32, %c0_i32_0 : i32, i32
  }
  func.func @transform_2(%arg0: i32, %arg1: i32) -> (i32, i32) {
    %c0_i32 = arith.constant 0 : i32
    %c0_i32_0 = arith.constant 0 : i32
    %c0_i32_1 = arith.constant 0 : i32
    return %c0_i32, %c0_i32_0 : i32, i32
  }
  func.func @transform_3(%arg0: i32, %arg1: i32) -> (i32, i32) {
    %c0_i32 = arith.constant 0 : i32
    %c0_i32_0 = arith.constant 0 : i32
    return %c0_i32, %arg1 : i32, i32
  }
  func.func @transform_4(%arg0: i32, %arg1: i32) -> (i32, i32) {
    %c0_i32 = arith.constant 0 : i32
    %c0_i32_0 = arith.constant 0 : i32
    return %c0_i32, %arg1 : i32, i32
  }
  func.func @transform_5(%arg0: i32, %arg1: i32) -> (i32, i32) {
    %c0_i32 = arith.constant 0 : i32
    return %arg0, %arg1 : i32, i32
  }
}

</mosaic_0001>

<llo_original>
// kernel: prenorm_linear.1
$region0: #{prenorm_linear.1}
  #allocation0 [shape = 'u32[]', space=smem, size = 0x4, offset = 0x4, fixed_abs, tag = 'smem constant byte address 0x4 - core index']
  #allocation1 [shape = 'u32[144,128]{1,0:T(1,128)}', space=vmem, size = 0x12000, scoped, tag = 'internal scratch']
  #allocation2 [shape = 'f32[16,128]{1,0:T(8,128)}', space=vmem, size = 0x2000, scoped, tag = 'scratch operand']
  %s0 = inlined_call_operand.vmem [shape: f32[16,128], index: 0, kind: input, shape index: {}]
  %s1 = inlined_call_operand.vmem [shape: f32[1,128], index: 1, kind: input, shape index: {}]
  %s2 = inlined_call_operand.vmem [shape: f32[1,128], index: 2, kind: input, shape index: {}]
  %s3 = inlined_call_operand.vmem [shape: f32[128,128], index: 3, kind: input, shape index: {}]
  %s4 = inlined_call_operand.vmem [shape: f32[1,128], index: 4, kind: input, shape index: {}]
  %s5 = inlined_call_operand.vmem [shape: f32[16,128], index: 5, kind: output, shape index: {}]
  %s6 = sld [smem:[#allocation0]]
  $region34: #{prenorm_linear.1} parent=0
    _
  %s8 = ssub.s32 1, %s6
  %s9 = scalar_select 0, %s8, %s6
  // Predicated region
  $region2: #{prenorm_linear.1} parent=0 // pred_check
    _
  $region3: #{prenorm_linear.1} parent=0 // pred_check_branch
    %11 = sbr.rel (0) target = $region5
  $region4: #{prenorm_linear.1} parent=0 // pred_region
    _
  $region5: #{prenorm_linear.1} parent=0 // pred_fallthru
    _
  // Predicated region
  $region6: #{prenorm_linear.1} parent=0 // pred_check
    _
  $region7: #{prenorm_linear.1} parent=0 // pred_check_branch
    %13 = sbr.rel (0) target = $region9
  $region8: #{prenorm_linear.1} parent=0 // pred_region
    _
  $region9: #{prenorm_linear.1} parent=0 // pred_fallthru
    _
  // Predicated region
  $region10: #{prenorm_linear.1} parent=0 // pred_check
    _
  $region11: #{prenorm_linear.1} parent=0 // pred_check_branch
    %15 = sbr.rel (0) target = $region13
  $region12: #{prenorm_linear.1} parent=0 // pred_region
    _
  $region13: #{prenorm_linear.1} parent=0 // pred_fallthru
    _
  // Predicated region
  $region14: #{prenorm_linear.1} parent=0 // pred_check
    _
  $region15: #{prenorm_linear.1} parent=0 // pred_check_branch
    %17 = sbr.rel (0) target = $region17
  $region16: #{prenorm_linear.1} parent=0 // pred_region
    _
  $region17: #{prenorm_linear.1} parent=0 // pred_fallthru
    _
  // Predicated region
  $region18: #{prenorm_linear.1} parent=0 // pred_check
    _
  $region19: #{prenorm_linear.1} parent=0 // pred_check_branch
    %19 = sbr.rel (0) target = $region21
  $region20: #{prenorm_linear.1} parent=0 // pred_region
    _
  $region21: #{prenorm_linear.1} parent=0 // pred_fallthru
    _
  %p20 = scmp.eq.s32.totalorder 0, 0
  // Predicated region
  $region22: #{prenorm_linear.1} parent=0 // pred_check
    %p21 = pneg %p20
  $region23: #{prenorm_linear.1} parent=0 // pred_check_branch
    %23 = sbr.rel (%p21) target = $region25
  $region24: #{prenorm_linear.1} parent=0 // pred_region
    %v24 = vld [vmem:[%s0] sm:$0xff]
    %v25 = vld [vmem:[%s0 + $0x8] sm:$0xff]
    %26 = vadd.xlane.f32.xlu0 %v24
    %v27 = vpop.xlane.xlu0 %26
    %28 = vadd.xlane.f32.xlu0 %v25
    %v29 = vpop.xlane.xlu0 %28
    %v30 = vmul.f32 %v27, 0.03125
    %v31 = vmul.f32 %v29, 0.03125
    %v32 = vsub.f32 %v24, %v30
    %v33 = vsub.f32 %v25, %v31
    %v34 = vlaneseq
    %v35 = vand.u32 %v34, 127
    %vm36 = vcmp.lt.s32.totalorder %v35, 32
    %v37 = vsel %vm36, %v32, 0.0
    %v38 = vsel %vm36, %v33, 0.0
    %v39 = vmul.f32 %v37, %v37
    %v40 = vmul.f32 %v38, %v38
    %41 = vadd.xlane.f32.xlu0 %v39
    %v42 = vpop.xlane.xlu0 %41
    %43 = vadd.xlane.f32.xlu0 %v40
    %v44 = vpop.xlane.xlu0 %43
    %v45 = vmul.f32 %v42, 0.03125
    %v46 = vmul.f32 %v44, 0.03125
    %v47 = vadd.f32 %v45, 1e-05
    %v48 = vadd.f32 %v46, 1e-05
    %v49 = vrsqrt.pop %v47
    %v50 = vrsqrt.pop %v48
    %v51 = vmul.f32 %v37, %v49
    %v52 = vmul.f32 %v38, %v50
    %v53 = vld [vmem:[%s1] sm:$0x1]
    %v55 = vlaneseq
    %v56 = vshrl.u32 %v55, 7
    %v57 = vsub.s32 0, %v56
    %v58 = vrot.slane %v53, %v57
    %v60 = vmul.f32 %v51, %v58
    %v61 = vmul.f32 %v52, %v58
    %v62 = vld [vmem:[%s2] sm:$0x1]
    %v64 = vlaneseq
    %v65 = vshrl.u32 %v64, 7
    %v66 = vsub.s32 0, %v65
    %v67 = vrot.slane %v62, %v66
    %v69 = vadd.f32 %v60, %v67
    %v70 = vadd.f32 %v61, %v67
    %71 = vst [vmem:[#allocation2] sm:$0xff] %v69
    %72 = vst [vmem:[#allocation2 + $0x8] sm:$0xff] %v70
  $region25: #{prenorm_linear.1} parent=0 // pred_fallthru
    _
  %v73 = vld [vmem:[#allocation2] sm:$0xff]
  %v74 = vld [vmem:[#allocation2 + $0x8] sm:$0xff]
  %v75 = vld [vmem:[%s3] sm:$0xff]
  %v76 = vld [vmem:[%s3 + $0x8] sm:$0xff]
  %v77 = vld [vmem:[%s3 + $0x10] sm:$0xff]
  %v78 = vld [vmem:[%s3 + $0x18] sm:$0xff]
  %v79 = vld [vmem:[%s3 + $0x20] sm:$0xff]
  %v80 = vld [vmem:[%s3 + $0x28] sm:$0xff]
  %v81 = vld [vmem:[%s3 + $0x30] sm:$0xff]
  %v82 = vld [vmem:[%s3 + $0x38] sm:$0xff]
  %v83 = vld [vmem:[%s3 + $0x40] sm:$0xff]
  %v84 = vld [vmem:[%s3 + $0x48] sm:$0xff]
  %v85 = vld [vmem:[%s3 + $0x50] sm:$0xff]
  %v86 = vld [vmem:[%s3 + $0x58] sm:$0xff]
  %v87 = vld [vmem:[%s3 + $0x60] sm:$0xff]
  %v88 = vld [vmem:[%s3 + $0x68] sm:$0xff]
  %v89 = vld [vmem:[%s3 + $0x70] sm:$0xff]
  %v90 = vld [vmem:[%s3 + $0x78] sm:$0xff]
  %v91 = vld [vmem:[%s4] sm:$0x1]
  %v93 = vlaneseq
  %v94 = vshrl.u32 %v93, 7
  %v95 = vsub.s32 0, %v94
  %v96 = vrot.slane %v91, %v95
  %98 = vmatprep.subr.mxu0 0.0
  %99 = vmatpush1.msra.mxu0 %v75
  %100 = vmatprep.subr.mxu0 0.0
  %101 = vmatpush1.msra.mxu0 %v76
  %102 = vmatprep.subr.mxu0 0.0
  %103 = vmatpush1.msra.mxu0 %v77
  %104 = vmatprep.subr.mxu0 0.0
  %105 = vmatpush1.msra.mxu0 %v78
  %106 = vmatprep.subr.mxu0 0.0
  %107 = vmatpush1.msra.mxu0 %v79
  %108 = vmatprep.subr.mxu0 0.0
  %109 = vmatpush1.msra.mxu0 %v80
  %110 = vmatprep.subr.mxu0 0.0
  %111 = vmatpush1.msra.mxu0 %v81
  %112 = vmatprep.subr.mxu0 0.0
  %113 = vmatpush1.msra.mxu0 %v82
  %114 = vmatprep.subr.mxu0 0.0
  %115 = vmatpush1.msra.mxu0 %v83
  %116 = vmatprep.subr.mxu0 0.0
  %117 = vmatpush1.msra.mxu0 %v84
  %118 = vmatprep.subr.mxu0 0.0
  %119 = vmatpush1.msra.mxu0 %v85
  %120 = vmatprep.subr.mxu0 0.0
  %121 = vmatpush1.msra.mxu0 %v86
  %122 = vmatprep.subr.mxu0 0.0
  %123 = vmatpush1.msra.mxu0 %v87
  %124 = vmatprep.subr.mxu0 0.0
  %125 = vmatpush1.msra.mxu0 %v88
  %126 = vmatprep.subr.mxu0 0.0
  %127 = vmatpush1.msra.mxu0 %v89
  %128 = vmatprep.subr.mxu0 0.0
  %129 = vmatpush1.msra.mxu0 %v90
  %130 = vmatprep.subr.mxu0 0.0
  %131 = vmatpush1.msra.mxu0 0.0
  %132 = vmatprep.subr.mxu0 0.0
  %133 = vmatpush1.msra.mxu0 0.0
  %134 = vmatprep.subr.mxu0 0.0
  %135 = vmatpush1.msra.mxu0 0.0
  %136 = vmatprep.subr.mxu0 0.0
  %137 = vmatpush1.msra.mxu0 0.0
  %138 = vmatprep.subr.mxu0 0.0
  %139 = vmatpush1.msra.mxu0 0.0
  %140 = vmatprep.subr.mxu0 0.0
  %141 = vmatpush1.msra.mxu0 0.0
  %142 = vmatprep.subr.mxu0 0.0
  %143 = vmatpush1.msra.mxu0 0.0
  %144 = vmatprep.subr.mxu0 0.0
  %145 = vmatpush1.msra.mxu0 0.0
  %146 = vmatprep.subr.mxu0 0.0
  %147 = vmatpush1.msra.mxu0 0.0
  %148 = vmatprep.subr.mxu0 0.0
  %149 = vmatpush1.msra.mxu0 0.0
  %150 = vmatprep.subr.mxu0 0.0
  %151 = vmatpush1.msra.mxu0 0.0
  %152 = vmatprep.subr.mxu0 0.0
  %153 = vmatpush1.msra.mxu0 0.0
  %154 = vmatprep.subr.mxu0 0.0
  %155 = vmatpush1.msra.mxu0 0.0
  %156 = vmatprep.subr.mxu0 0.0
  %157 = vmatpush1.msra.mxu0 0.0
  %158 = vmatprep.subr.mxu0 0.0
  %159 = vmatpush1.msra.mxu0 0.0
  %160 = vmatprep.subr.mxu0 0.0
  %161 = vmatpush1.msra.mxu0 0.0
  %162 = vmatprep.mubr.f32.mxu0 0.0
  %163 = vmatmul.mubr.f32.gmra.mrb[0].mxu0 %v73
  %v164 = vpop.f32.mrb[0].mxu0
  %v165 = vadd.f32 %v96, %v164
  %v166 = vpop.f32.mrb[0].mxu0
  %167 = vmatprep.mubr.f32.mxu0 0.0
  %168 = vmatmul.mubr.f32.gmra.mrb[0].mxu0 %v74
  %v169 = vpop.f32.mrb[0].mxu0
  %v170 = vadd.f32 %v96, %v169
  %v171 = vpop.f32.mrb[0].mxu0
  %172 = vdwg.mxu0
  %173 = vst [vmem:[%s5] sm:$0xff] %v165
  %174 = vst [vmem:[%s5 + $0x8] sm:$0xff] %v170
  // Predicated region
  $region26: #{prenorm_linear.1} parent=0 // pred_check
    _
  $region27: #{prenorm_linear.1} parent=0 // pred_check_branch
    %176 = sbr.rel (0) target = $region29
  $region28: #{prenorm_linear.1} parent=0 // pred_region
    _
  $region29: #{prenorm_linear.1} parent=0 // pred_fallthru
    _
  // Predicated region
  $region30: #{prenorm_linear.1} parent=0 // pred_check
    _
  $region31: #{prenorm_linear.1} parent=0 // pred_check_branch
    %178 = sbr.rel (0) target = $region33
  $region32: #{prenorm_linear.1} parent=0 // pred_region
    _
  $region33: #{prenorm_linear.1} parent=0 // pred_fallthru
    _

</llo_original>
